<compile_context>
chip_gen: v7x
topology: tpu7x:2x2x1
jax: 0.10.0
libtpu: 0.0.40
codegen_flags: <defaults>
</compile_context>

<pallas_src>
import functools

import jax
import jax.numpy as jnp
from jax.experimental import pallas as pl
from jax.experimental.pallas import tpu as pltpu


# ---------------------------------------------------------------------------
# In-kernel helpers
# ---------------------------------------------------------------------------

def _channel_conv_gate(pooled, w_ref, k_size):
    """k-tap zero-padded cross-correlation along C + sigmoid.

    pooled: (1, C) float32.  Returns the gate, shape (1, C) float32.
    """
    C = pooled.shape[1]
    pad = (k_size - 1) // 2
    yp = jnp.pad(pooled, ((0, 0), (pad, pad)))        # (1, C + 2*pad)
    conv = jnp.zeros_like(pooled)
    for j in range(k_size):                           # k_size is tiny: unroll
        conv = conv + w_ref[j] * yp[:, j:j + C]
    return jax.nn.sigmoid(conv)


def _pool_sums_f32(x_ref, hw):
    """Sum the (1, C, HW) block over HW with f32 accumulation.

    Chunked along lanes (static, lane-aligned starts, <= ~64 chunks) so a
    widening cast of a sub-32-bit slab never materializes a full-slab f32
    temp in VMEM.  Returns (1, C) float32.
    """
    C = x_ref.shape[1]
    if hw <= 512:
        return jnp.sum(x_ref[...].astype(jnp.float32), axis=-1)
    chunk = max(512, -(-hw // 64))                    # bound unroll at ~64 chunks
    chunk = -(-chunk // 128) * 128                    # lane-aligned chunk size
    acc = jnp.zeros((1, C), jnp.float32)
    for start in range(0, hw, chunk):                 # static starts / sizes
        size = min(chunk, hw - start)
        blk = x_ref[:, :, pl.ds(start, size)].astype(jnp.float32)
        acc = acc + jnp.sum(blk, axis=-1)
    return acc


# ---------------------------------------------------------------------------
# Kernels
# ---------------------------------------------------------------------------

def _eca_fused_kernel(w_ref, x_ref, o_ref, *, k_size, hw):
    """One batch slab per grid step: pool -> conv -> sigmoid -> rescale."""
    pooled = _pool_sums_f32(x_ref, hw) * (1.0 / hw)            # (1, C) f32
    gate = _channel_conv_gate(pooled, w_ref, k_size)           # (1, C) f32
    # Rescale in the native dtype (no f32 copy of the slab is kept live).
    o_ref[...] = x_ref[...] * gate[:, :, None].astype(o_ref.dtype)


def _eca_pool_kernel(x_ref, s_ref, *, hw_true, hw_tile, mask_tail):
    """Split path, pass 1: tiled f32 sum over the HW (lane) axis."""
    t = pl.program_id(2)

    @pl.when(t == 0)
    def _init():
        s_ref[...] = jnp.zeros_like(s_ref)

    xblk = x_ref[...].astype(jnp.float32)             # (1, tc, thw)
    if mask_tail:
        lane = jax.lax.broadcasted_iota(jnp.int32, xblk.shape, 2) + t * hw_tile
        xblk = jnp.where(lane < hw_true, xblk, 0.0)
    s_ref[...] += jnp.sum(xblk, axis=-1, keepdims=True)


def _eca_scale_kernel(x_ref, g_ref, o_ref):
    """Split path, pass 2: lane-dense elementwise rescale."""
    o_ref[...] = x_ref[...] * g_ref[...].astype(x_ref.dtype)


# ---------------------------------------------------------------------------
# Tiling / hardware helpers
# ---------------------------------------------------------------------------

_PER_BUFFER_BYTES = 4 * 1024 * 1024    # target per-block size for the split path
_SPLIT_VMEM_LIMIT = 32 * 1024 * 1024


def _vmem_capacity_bytes():
    """Per-TensorCore VMEM capacity; conservative fallback if unavailable."""
    try:
        cap = getattr(pltpu.get_tpu_info(), "vmem_capacity_bytes", None)
        if cap:
            return int(cap)
    except Exception:
        pass
    return 64 * 1024 * 1024            # v7x-sized default (safe on v5e/v6e too)


def _pick_hw_tile(hw, rows, itemsize, budget_bytes, cap=None):
    """Lane (last-dim) tile: the full hw when allowed, else a multiple of 128."""
    if hw <= 128:
        return hw                                      # must equal the full dim
    if cap is not None:
        cap = max(128, (cap // 128) * 128)             # clamp to a legal lane tile
    if (cap is None or hw <= cap) and rows * hw * itemsize <= budget_bytes:
        return hw
    t = max(128, (budget_bytes // (rows * itemsize)) // 128 * 128)
    if cap is not None:
        t = min(t, cap)
    return min(t, (hw // 128) * 128)


def _pick_c_tile(C, cap=None):
    """Channel (sublane) tile: full C, or a fixed multiple of 8.  Ragged last
    tiles are handled by pl.cdiv grids + Pallas block clipping."""
    limit = 256 if cap is None else max(8, (cap // 8) * 8)
    return C if C <= limit else limit


# ---------------------------------------------------------------------------
# Wrapper
# ---------------------------------------------------------------------------

def eca_block(x, weight, k_size=3, *, force_split=False,
              hw_tile_cap=None, c_tile_cap=None):
    """ECA forward.  x: (B, C, H, W); weight: Conv1d(1,1,k) weight, accepted
    as shape (k,), (1,k) or (1,1,k)."""
    B, C, H, W = x.shape
    HW = H * W
    dtype = x.dtype
    itemsize = jnp.dtype(dtype).itemsize
    weight = jnp.asarray(weight, jnp.float32).reshape(-1)
    assert weight.shape[0] == k_size

    x_flat = x.reshape(B, C, HW)                       # free reshape, HW on lanes
    slab_bytes = C * HW * itemsize

    vmem_cap = _vmem_capacity_bytes()
    # Fused path double-buffers in+out slabs (4x slab); keep 4x under ~57% of
    # VMEM and cap the scoped limit at 3/4 of physical (96 MiB on v5e/v6e,
    # 48 MiB on v7x).
    fused_slab_limit = max(4 * 1024 * 1024, vmem_cap // 7)
    fused_vmem_limit = (vmem_cap * 3) // 4

    use_split = force_split or slab_bytes > fused_slab_limit
    # 64 MiB-VMEM parts (v7x) have 2 TensorCores per chip: at B < 2 the fused
    # grid=(B,) keeps only one core busy, while both split-path grids are
    # parallel over (B, C-tiles, HW-tiles).
    if B < 2 and vmem_cap <= 64 * 1024 * 1024 and slab_bytes > 4 * 1024 * 1024:
        use_split = True

    if not use_split:
        # ---- fused single-pass kernel, grid over batch ----------------------
        out_flat = pl.pallas_call(
            functools.partial(_eca_fused_kernel, k_size=k_size, hw=HW),
            out_shape=jax.ShapeDtypeStruct((B, C, HW), dtype),
            grid_spec=pltpu.PrefetchScalarGridSpec(
                num_scalar_prefetch=1,                           # conv weight -> SMEM
                grid=(B,),
                in_specs=[pl.BlockSpec((1, C, HW), lambda b, w: (b, 0, 0))],
                out_specs=pl.BlockSpec((1, C, HW), lambda b, w: (b, 0, 0)),
            ),
            compiler_params=pltpu.CompilerParams(
                dimension_semantics=("parallel",),
                vmem_limit_bytes=fused_vmem_limit),
            cost_estimate=pl.CostEstimate(
                flops=2 * B * C * HW + 2 * B * C * k_size,
                transcendentals=B * C,
                bytes_accessed=2 * B * C * HW * itemsize),
        )(weight, x_flat)
        return out_flat.reshape(B, C, H, W)

    # ---- split path, pass 1: tiled f32 pooling sums (B, C, 1) ---------------
    tc1 = _pick_c_tile(C, c_tile_cap)
    thw1 = _pick_hw_tile(HW, tc1, itemsize, _PER_BUFFER_BYTES, cap=hw_tile_cap)
    grid1 = (B, pl.cdiv(C, tc1), pl.cdiv(HW, thw1))
    sums = pl.pallas_call(
        functools.partial(_eca_pool_kernel, hw_true=HW, hw_tile=thw1,
                          mask_tail=(HW % thw1 != 0)),
        out_shape=jax.ShapeDtypeStruct((B, C, 1), jnp.float32),
        grid_spec=pltpu.PrefetchScalarGridSpec(
            num_scalar_prefetch=0,
            grid=grid1,
            in_specs=[pl.BlockSpec((1, tc1, thw1), lambda b, c, t: (b, c, t))],
            out_specs=pl.BlockSpec((1, tc1, 1), lambda b, c, t: (b, c, 0)),
        ),
        compiler_params=pltpu.CompilerParams(
            dimension_semantics=("parallel", "parallel", "arbitrary"),
            vmem_limit_bytes=_SPLIT_VMEM_LIMIT),
        cost_estimate=pl.CostEstimate(
            flops=B * C * HW,
            transcendentals=0,
            bytes_accessed=B * C * HW * itemsize + B * C * 4),
    )(x_flat)

    # ---- tiny k-tap channel conv + sigmoid on the pooled (B, C) vector ------
    pad = (k_size - 1) // 2
    pooled = sums[:, :, 0] * (1.0 / HW)                        # (B, C) f32
    yp = jnp.pad(pooled, ((0, 0), (pad, pad)))
    conv = jnp.zeros_like(pooled)
    for j in range(k_size):
        conv = conv + weight[j] * yp[:, j:j + C]
    gate = jax.nn.sigmoid(conv)[:, :, None]                    # (B, C, 1) f32

    # ---- split path, pass 2: tiled elementwise rescale ----------------------
    tc2 = _pick_c_tile(C, c_tile_cap)
    thw2 = _pick_hw_tile(HW, tc2, itemsize, _PER_BUFFER_BYTES, cap=hw_tile_cap)
    grid2 = (B, pl.cdiv(C, tc2), pl.cdiv(HW, thw2))
    out_flat = pl.pallas_call(
        _eca_scale_kernel,
        out_shape=jax.ShapeDtypeStruct((B, C, HW), dtype),
        grid_spec=pltpu.PrefetchScalarGridSpec(
            num_scalar_prefetch=0,
            grid=grid2,
            in_specs=[
                pl.BlockSpec((1, tc2, thw2), lambda b, c, t: (b, c, t)),  # x
                pl.BlockSpec((1, tc2, 1), lambda b, c, t: (b, c, 0)),     # gate
            ],
            out_specs=pl.BlockSpec((1, tc2, thw2), lambda b, c, t: (b, c, t)),
        ),
        compiler_params=pltpu.CompilerParams(
            dimension_semantics=("parallel", "parallel", "parallel"),
            vmem_limit_bytes=_SPLIT_VMEM_LIMIT),
        cost_estimate=pl.CostEstimate(
            flops=B * C * HW,
            transcendentals=0,
            bytes_accessed=2 * B * C * HW * itemsize + B * C * 4),
    )(x_flat, gate)
    return out_flat.reshape(B, C, H, W)


# ---------------------------------------------------------------------------
# Pure-JAX reference (matches the PyTorch module semantics)
# ---------------------------------------------------------------------------

def eca_reference(x, weight):
    B, C, H, W = x.shape
    weight = jnp.asarray(weight, jnp.float32).reshape(-1)
    k = weight.shape[0]
    pad = (k - 1) // 2
    y = jnp.mean(x.astype(jnp.float32), axis=(2, 3))          # (B, C)
    yp = jnp.pad(y, ((0, 0), (pad, pad)))
    conv = sum(weight[j] * yp[:, j:j + C] for j in range(k))
    gate = jax.nn.sigmoid(conv).astype(x.dtype)
    return x * gate[:, :, None, None]


if __name__ == "__main__":
    key = jax.random.PRNGKey(0)
    kx, kw, kx2, kx3, kx4 = jax.random.split(key, 5)

    k_size = 3
    bound = 1.0 / (k_size ** 0.5)
    weight = jax.random.uniform(kw, (k_size,), dtype=jnp.float32,
                                minval=-bound, maxval=bound)

    # Case 1: fused single-pass path (B=2, C=4, 16x16 -> HW=256, lane-dense).
    x1 = jax.random.normal(kx, (2, 4, 16, 16), dtype=jnp.float32)
    ref1 = eca_reference(x1, weight)
    out1 = jax.block_until_ready(eca_block(x1, weight, k_size=k_size))
    assert out1.shape == ref1.shape and out1.dtype == ref1.dtype
    assert jnp.allclose(out1, ref1, atol=1e-5, rtol=1e-5), "fused path mismatch"

    # Case 2: same input through the two-pass split path with small lane tiles.
    out2 = jax.block_until_ready(
        eca_block(x1, weight, k_size=k_size, force_split=True, hw_tile_cap=128))
    assert jnp.allclose(out2, ref1, atol=1e-5, rtol=1e-5), "split path mismatch"

    # Case 3: small ragged spatial map (7x7 -> HW=49 < 128), fused, no padding.
    x3 = jax.random.normal(kx2, (2, 8, 7, 7), dtype=jnp.float32)
    ref3 = eca_reference(x3, weight)
    out3 = jax.block_until_ready(eca_block(x3, weight, k_size=k_size))
    assert jnp.allclose(out3, ref3, atol=1e-5, rtol=1e-5), "ragged-HW fused mismatch"

    # Case 4: split path with ragged HW tail AND ragged channel tile
    #         (B=1, C=12, 12x12 -> HW=144; hw tile 128+16 tail, c tile 8+4 tail).
    x4 = jax.random.normal(kx3, (1, 12, 12, 12), dtype=jnp.float32)
    ref4 = eca_reference(x4, weight)
    out4 = jax.block_until_ready(
        eca_block(x4, weight, k_size=k_size, force_split=True,
                  hw_tile_cap=128, c_tile_cap=8))
    assert jnp.allclose(out4, ref4, atol=1e-5, rtol=1e-5), "ragged split mismatch"

    # Case 5: fused path with chunked pooling (HW=1600 > 512, incl. a 64-lane tail).
    x5 = jax.random.normal(kx4, (2, 8, 40, 40), dtype=jnp.float32)
    ref5 = eca_reference(x5, weight)
    out5 = jax.block_until_ready(eca_block(x5, weight, k_size=k_size))
    assert jnp.allclose(out5, ref5, atol=1e-5, rtol=1e-5), "chunked pool mismatch"

    print("KERNEL_OK")
</pallas_src>

<mosaic_0001>
module attributes {stable_mosaic.version = 11 : i64} {
  func.func @_eca_fused_kernel(%arg0: i32, %arg1: memref<3xf32, #tpu.memory_space<smem>>, %arg2: memref<1x4x256xf32, #tpu.memory_space<vmem>>, %arg3: memref<1x4x256xf32, #tpu.memory_space<vmem>>) attributes {dimension_semantics = [#tpu.dimension_semantics<parallel>], iteration_bounds = array<i64: 2>, scalar_prefetch = 1 : i64, scratch_operands = 0 : i64, tpu.core_type = #tpu.core_type<tc>, window_params = [{transform_indices = @transform_0, window_bounds = array<i64: 1, 4, 256>}, {transform_indices = @transform_1, window_bounds = array<i64: 1, 4, 256>}]} {
    %c0 = arith.constant 0 : index
    %c0_0 = arith.constant 0 : index
    %c0_1 = arith.constant 0 : index
    %0 = vector.load %arg2[%c0, %c0_0, %c0_1] : memref<1x4x256xf32, #tpu.memory_space<vmem>>, vector<1x4x256xf32>
    %cst = arith.constant dense<0.000000e+00> : vector<1x4xf32>
    %1 = vector.multi_reduction <add>, %0, %cst [2] : vector<1x4x256xf32> to vector<1x4xf32>
    %cst_2 = arith.constant 3.906250e-03 : f32
    %2 = vector.broadcast %cst_2 : f32 to vector<1x4xf32>
    %3 = arith.mulf %1, %2 : vector<1x4xf32>
    %c0_i32 = arith.constant 0 : i32
    %4 = arith.sitofp %c0_i32 : i32 to f32
    %5 = vector.broadcast %4 : f32 to vector<1x1xf32>
    %6 = tpu.concatenate %5, %3 in 1 : vector<1x1xf32>, vector<1x4xf32> -> vector<1x5xf32>
    %7 = vector.broadcast %4 : f32 to vector<1x1xf32>
    %8 = tpu.concatenate %6, %7 in 1 : vector<1x5xf32>, vector<1x1xf32> -> vector<1x6xf32>
    %cst_3 = arith.constant 0.000000e+00 : f32
    %9 = vector.broadcast %cst_3 : f32 to vector<1x4xf32>
    %c0_4 = arith.constant 0 : index
    %10 = memref.load %arg1[%c0_4] : memref<3xf32, #tpu.memory_space<smem>>
    %11 = vector.extract_strided_slice %8 {offsets = [0, 0], sizes = [1, 4], strides = [1, 1]} : vector<1x6xf32> to vector<1x4xf32>
    %12 = vector.broadcast %10 : f32 to vector<1x4xf32>
    %13 = arith.mulf %12, %11 : vector<1x4xf32>
    %14 = arith.addf %9, %13 : vector<1x4xf32>
    %c1 = arith.constant 1 : index
    %15 = memref.load %arg1[%c1] : memref<3xf32, #tpu.memory_space<smem>>
    %16 = vector.extract_strided_slice %8 {offsets = [0, 1], sizes = [1, 4], strides = [1, 1]} : vector<1x6xf32> to vector<1x4xf32>
    %17 = vector.broadcast %15 : f32 to vector<1x4xf32>
    %18 = arith.mulf %17, %16 : vector<1x4xf32>
    %19 = arith.addf %14, %18 : vector<1x4xf32>
    %c2 = arith.constant 2 : index
    %20 = memref.load %arg1[%c2] : memref<3xf32, #tpu.memory_space<smem>>
    %21 = vector.extract_strided_slice %8 {offsets = [0, 2], sizes = [1, 4], strides = [1, 1]} : vector<1x6xf32> to vector<1x4xf32>
    %22 = vector.broadcast %20 : f32 to vector<1x4xf32>
    %23 = arith.mulf %22, %21 : vector<1x4xf32>
    %24 = arith.addf %19, %23 : vector<1x4xf32>
    %25 = arith.negf %24 : vector<1x4xf32>
    %26 = math.exp %25 : vector<1x4xf32>
    %cst_5 = arith.constant 1.000000e+00 : f32
    %27 = vector.broadcast %cst_5 : f32 to vector<1x4xf32>
    %28 = arith.addf %27, %26 : vector<1x4xf32>
    %29 = arith.divf %27, %28 : vector<1x4xf32>
    %c0_6 = arith.constant 0 : index
    %c0_7 = arith.constant 0 : index
    %c0_8 = arith.constant 0 : index
    %30 = vector.load %arg2[%c0_6, %c0_7, %c0_8] : memref<1x4x256xf32, #tpu.memory_space<vmem>>, vector<1x4x256xf32>
    %31 = vector.shape_cast %29 : vector<1x4xf32> to vector<1x4x1xf32>
    %32 = vector.broadcast %31 : vector<1x4x1xf32> to vector<1x4x256xf32>
    %33 = arith.mulf %30, %32 : vector<1x4x256xf32>
    %c0_9 = arith.constant 0 : index
    %c0_10 = arith.constant 0 : index
    %c0_11 = arith.constant 0 : index
    %34 = vector.load %arg3[%c0_9, %c0_10, %c0_11] : memref<1x4x256xf32, #tpu.memory_space<vmem>>, vector<1x4x256xf32>
    tpu.vector_store %arg3[%c0_9, %c0_10, %c0_11], %33 {strides = array<i32>} : memref<1x4x256xf32, #tpu.memory_space<vmem>>, vector<1x4x256xf32>,
    return
  }
  func.func @transform_0(%arg0: i32, %arg1: memref<3xf32, #tpu.memory_space<smem>>) -> (i32, i32, i32) {
    %c0_i32 = arith.constant 0 : i32
    %c0_i32_0 = arith.constant 0 : i32
    %c0_i32_1 = arith.constant 0 : i32
    return %arg0, %c0_i32, %c0_i32_0 : i32, i32, i32
  }
  func.func @transform_1(%arg0: i32, %arg1: memref<3xf32, #tpu.memory_space<smem>>) -> (i32, i32, i32) {
    %c0_i32 = arith.constant 0 : i32
    %c0_i32_0 = arith.constant 0 : i32
    %c0_i32_1 = arith.constant 0 : i32
    return %arg0, %c0_i32, %c0_i32_0 : i32, i32, i32
  }
}

</mosaic_0001>

<llo_original>
// kernel: tpu_custom_call.1
$region0: #{tpu_custom_call.1}
  #allocation0 [shape = 'u32[]', space=smem, size = 0x4, offset = 0x4, fixed_abs, tag = 'smem constant byte address 0x4 - core index']
  #allocation1 [shape = 'u32[144,128]{1,0:T(1,128)}', space=vmem, size = 0x12000, scoped, tag = 'internal scratch']
  #allocation2 [shape = 's32[1]{0}', space=sflag, size = 0x4, scoped, tag = 'scoped memory for tpu_custom_call.1']
  #allocation3 [shape = 'u8[512]{0}', space=smem, size = 0x200, scoped, tag = 'prefetched SMEM operand 0']
  %s0 = inlined_call_operand.hbm [shape: f32[3], index: 0, kind: input, shape index: {}]
  %s1 = inlined_call_operand.hbm [shape: f32[2,4,256], index: 1, kind: input, shape index: {}]
  %s2 = inlined_call_operand.hbm [shape: f32[2,4,256], index: 2, kind: output, shape index: {}]
  %s3 = sld [smem:[#allocation0]]
  $region41: #{tpu_custom_call.1} parent=0
    _
  %s5 = ssub.s32 1, %s3
  %s6 = scalar_select 0, %s5, %s3
  %8 = dma.hbm_to_smem %s0, 16, [#allocation3], [#allocation2]
  %9 = dma.done [#allocation2], 16
  %10 = sfence
  $region1: #{tpu_custom_call.1} parent=0
    #allocation4 [shape = 'u8[8192]{0}', space=vmem, size = 0x2000, scoped, tag = 'input window, operand 1']
    #allocation5 [shape = 's32[2]{0}', space=sflag, size = 0x8, scoped, tag = 'scoped memory for tpu_custom_call.1']
    #allocation6 [shape = 's32[2]{0}', space=sflag, size = 0x8, scoped, tag = 'scoped memory for tpu_custom_call.1']
    #allocation7 [shape = 'u8[8192]{0}', space=vmem, size = 0x2000, scoped, tag = 'output window, operand 0']
    %11 = vsyncpa [#allocation5], 0
    %s12 = scalar_lea.sflag [#allocation5], 1
    %13 = vsyncpa %s12, 0
    %14 = vsyncpa [#allocation6], 0
    %s15 = scalar_lea.sflag [#allocation6], 1
    %16 = vsyncpa %s15, 0
    loop: start=0, step=1, limit=4
    $region2: #{tpu_custom_call.1} parent=1 // loop_pre_header
      _
    $region3: #{tpu_custom_call.1} parent=1 // loop_header
      %s18 = sphi 0, %s22
      %p19 = scmp.ge.s32.totalorder %s18, 4
      %s28 = sphi 0, %s30
      %s31 = sphi 0, %s28
      %s32 = sphi 0, %s31
      %s48 = sphi 0, %s32
      %s54 = sphi 0, %s56
      %s57 = sphi 0, %s54
      %s58 = sphi 0, %s57
      %s74 = sphi 0, %s58
    $region4: #{tpu_custom_call.1} parent=1 // loop_header_branch
      %21 = sbr.rel (%p19) target = $region8
    $region5: #{tpu_custom_call.1} parent=1 // loop_body
      %s23 = ssub.s32 %s18, 1
      %s24 = ssub.s32 %s18, 2
      %s25 = sadd.s32 %s18, 1
      %s26 = ssub.s32 %s18, %s25
      %p27 = scmp.eq.s32.totalorder %s26, 0
      %s29 = sadd.s32 %s28, 1
      %s30 = scalar_select %p27, %s28, %s29
      %p33 = pneg %p27
      %p34 = scmp.eq.s32.totalorder %s18, 1
      %p35 = por %p33, %p34
      %p36 = scmp.ne.s32.totalorder %s28, %s31
      %p37 = scmp.eq.s32.totalorder %s18, 0
      %p38 = por %p36, %p37
      %p39 = scmp.ne.s32.totalorder %s28, %s31
      %p40 = scmp.eq.s32.totalorder %s23, 1
      %p41 = por %p39, %p40
      %p42 = scmp.ne.s32.totalorder %s31, %s32
      %p43 = scmp.eq.s32.totalorder %s23, 0
      %p44 = por %p42, %p43
      %p45 = scmp.ne.s32.totalorder %s31, %s32
      %p46 = scmp.eq.s32.totalorder %s24, 1
      %p47 = por %p45, %p46
      %p49 = scmp.ne.s32.totalorder %s32, %s48
      %p50 = scmp.eq.s32.totalorder %s24, 0
      %p51 = por %p49, %p50
      %s52 = ssub.s32 %s18, %s25
      %p53 = scmp.eq.s32.totalorder %s52, 0
      %s55 = sadd.s32 %s54, 1
      %s56 = scalar_select %p53, %s54, %s55
      %p59 = pneg %p53
      %p60 = scmp.eq.s32.totalorder %s18, 1
      %p61 = por %p59, %p60
      %p62 = scmp.ne.s32.totalorder %s54, %s57
      %p63 = scmp.eq.s32.totalorder %s18, 0
      %p64 = por %p62, %p63
      %p65 = scmp.ne.s32.totalorder %s54, %s57
      %p66 = scmp.eq.s32.totalorder %s23, 1
      %p67 = por %p65, %p66
      %p68 = scmp.ne.s32.totalorder %s57, %s58
      %p69 = scmp.eq.s32.totalorder %s23, 0
      %p70 = por %p68, %p69
      %p71 = scmp.ne.s32.totalorder %s57, %s58
      %p72 = scmp.eq.s32.totalorder %s24, 1
      %p73 = por %p71, %p72
      %p75 = scmp.ne.s32.totalorder %s58, %s74
      %p76 = scmp.eq.s32.totalorder %s24, 0
      %p77 = por %p75, %p76
      %p78 = scmp.le.s32.totalorder 1, %s18
      %p79 = scmp.lt.s32.totalorder %s18, 3
      %p80 = pnand %p78, %p79
      %p81 = pneg %p80
      // Predicated region
      $region9: #{tpu_custom_call.1} parent=5 // pred_check
        _
      $region10: #{tpu_custom_call.1} parent=5 // pred_check_branch
        %83 = sbr.rel (%p80) target = $region12
      $region11: #{tpu_custom_call.1} parent=5 // pred_region
        %s84 = ssub.s32 %s18, 1
      $region12: #{tpu_custom_call.1} parent=5 // pred_fallthru
        _
      %p85 = scmp.lt.s32.totalorder %s18, 2
      // Predicated region
      $region13: #{tpu_custom_call.1} parent=5 // pred_check
        %p86 = pneg %p85
      $region14: #{tpu_custom_call.1} parent=5 // pred_check_branch
        %88 = sbr.rel (%p86) target = $region16
      $region15: #{tpu_custom_call.1} parent=5 // pred_region
        // Predicated region
        $region17: #{tpu_custom_call.1} parent=15 // pred_check
          %p89 = pneg %p38
        $region18: #{tpu_custom_call.1} parent=15 // pred_check_branch
          %91 = sbr.rel (%p89) target = $region20
        $region19: #{tpu_custom_call.1} parent=15 // pred_region
          %s92 = sand.u32 %s28, 1
          %s93 = scalar_lea.sflag [#allocation5], %s92
          %s94 = sand.u32 %s28, 1
          %s95 = smul.addr %s94, 8
          %s96 = scalar_lea.vmem [#allocation4], %s95
          %s98 = ssub.s32 128, 128
          %99 = vsyncadd %s93, %s98
          %s100 = smul.addr %s18, 2
          %s101 = smul.addr %s100, 64
          %s102 = scalar_lea.hbm %s1, %s101
          %s104 = sshll.u32 %s96, 4
          %s105 = int_to_ptr.vmem [resolvable:$true] %s104
          %107 = dma.hbm_to_vmem [thread:$0]  %s102, 128, %s105, %s93
        $region20: #{tpu_custom_call.1} parent=15 // pred_fallthru
          _
      $region16: #{tpu_custom_call.1} parent=5 // pred_fallthru
        _
      %p108 = scmp.le.s32.totalorder 1, %s18
      %p109 = scmp.lt.s32.totalorder %s18, 3
      %p110 = pnand %p108, %p109
      %p111 = pneg %p110
      // Predicated region
      $region21: #{tpu_custom_call.1} parent=5 // pred_check
        _
      $region22: #{tpu_custom_call.1} parent=5 // pred_check_branch
        %113 = sbr.rel (%p110) target = $region24
      $region23: #{tpu_custom_call.1} parent=5 // pred_region
        %s114 = ssub.s32 %s18, 1
        %s115 = sand.u32 %s31, 1
        %s116 = scalar_lea.sflag [#allocation5], %s115
        %s117 = sand.u32 %s31, 1
        %s118 = smul.addr %s117, 8
        %s119 = scalar_lea.vmem [#allocation4], %s118
        // Predicated region
        $region25: #{tpu_custom_call.1} parent=23 // pred_check
          %p120 = pneg %p44
        $region26: #{tpu_custom_call.1} parent=23 // pred_check_branch
          %122 = sbr.rel (%p120) target = $region28
        $region27: #{tpu_custom_call.1} parent=23 // pred_region
          %123 = dma.done %s116, 128
        $region28: #{tpu_custom_call.1} parent=23 // pred_fallthru
          _
        %s124 = sand.u32 %s31, 1
        %s125 = scalar_lea.sflag [#allocation5], %s124
        %s126 = sand.u32 %s31, 1
        %s127 = smul.addr %s126, 8
        %s128 = scalar_lea.vmem [#allocation4], %s127
        %p129 = pneg %p44
        %p130 = pneg %p41
        %p131 = pneg %p70
        %p132 = pneg %p67
        %s133 = sand.u32 %s57, 1
        %s134 = scalar_lea.sflag [#allocation6], %s133
        %s135 = sand.u32 %s57, 1
        %s136 = smul.addr %s135, 8
        %s137 = scalar_lea.vmem [#allocation7], %s136
        %v138 = vld [vmem:[%s119] sm:$0xff]
        %v140 = vcombine.high %v138, %v138
        %vm142 = vcmask 1043456
        %v143 = vsel %vm142, %v138, 0.0
        %v144 = vsel %vm142, %v140, 0.0
        %v145 = vadd.f32 %v143, %v144
        %146 = vadd.xlane.f32.xlu0 %v145
        %v147 = vpop.xlane.xlu0 %146
        %v148 = vmul.f32 %v147, 0.00390625
        %v150 = vlaneseq
        %v151 = vand.u32 %v150, 127
        %v152 = vadd.s32 %v151, 4294967295
        %v153 = vlaneseq
        %v154 = vshrl.u32 %v153, 7
        %v155 = vsub.s32 %v152, %v154
        %v156 = vrot.slane %v148, %v155
        %vm158 = vcmask 7168
        %v159 = vsel %vm158, 0.0, %v156
        %vm160 = vcmask 39936
        %v161 = vsel %vm160, %v159, 0.0
        %s162 = sld [smem:[#allocation3]]
        %v163 = vstv %s162
        %v164 = vmul.f32 %v163, %v161
        %v165 = vadd.f32 %v164, 0.0
        %s166 = sld [smem:[#allocation3 + $0x1]]
        %v167 = vstv %s166
        %v168 = vmul.f32 %v167, %v161
        %170 = vrot.lane.b32.xlu0 %v168, 127
        %v171 = vpop.permute.xlu0 %170
        %v173 = vadd.f32 %v165, %v171
        %s174 = sld [smem:[#allocation3 + $0x2]]
        %v175 = vstv %s174
        %v176 = vmul.f32 %v175, %v161
        %178 = vrot.lane.b32.xlu0 %v176, 126
        %v179 = vpop.permute.xlu0 %178
        %v181 = vadd.f32 %v173, %v179
        %v182 = vxor.u32 %v181, 2147483648
        %v183 = vmul.f32 %v182, 1.442695
        %v184 = vpow.pop %v183
        %v185 = vadd.f32 %v184, 1.0
        %v186 = vrcp.pop %v185
        %v187 = vmul.f32 1.0, %v186
        %v188 = vlaneseq
        %v189 = vshrl.u32 %v188, 7
        %v190 = vsub.s32 0, %v189
        %v191 = vrot.slane %v187, %v190
        %193 = vbcast.lane.b32.xlu0 %v191, 256
        %v194 = vpop.permute.xlu0 %193
        %v197 = vunpack.c.l.s4 839922192
        %v198 = vunpack.c.0.s8 %v197
        %v199 = vlaneseq
        %v200 = vshrl.u32 %v199, 7
        %v201 = vsub.s32 %v198, %v200
        %v202 = vrot.slane %v194, %v201
        %v204 = vmul.f32 %v138, %v202
        %205 = vst [vmem:[%s137] sm:$0xff] %v204
        %s206 = sand.u32 %s57, 1
        %s207 = scalar_lea.sflag [#allocation6], %s206
        %s208 = sand.u32 %s57, 1
        %s209 = smul.addr %s208, 8
        %s210 = scalar_lea.vmem [#allocation7], %s209
        // Predicated region
        $region29: #{tpu_custom_call.1} parent=23 // pred_check
          %p211 = pneg %p67
        $region30: #{tpu_custom_call.1} parent=23 // pred_check_branch
          %213 = sbr.rel (%p211) target = $region32
        $region31: #{tpu_custom_call.1} parent=23 // pred_region
          %s215 = ssub.s32 128, 128
          %216 = vsyncadd %s207, %s215
          %s217 = smul.addr %s23, 2
          %s218 = smul.addr %s217, 64
          %s219 = scalar_lea.hbm %s2, %s218
          %s221 = sshll.u32 %s210, 4
          %s222 = int_to_ptr.vmem [resolvable:$true] %s221
          %224 = dma.vmem_to_hbm [thread:$0]  %s222, 128, %s219, %s207
        $region32: #{tpu_custom_call.1} parent=23 // pred_fallthru
          _
      $region24: #{tpu_custom_call.1} parent=5 // pred_fallthru
        _
      %p225 = scmp.le.s32.totalorder 2, %s18
      // Predicated region
      $region33: #{tpu_custom_call.1} parent=5 // pred_check
        %p226 = pneg %p225
      $region34: #{tpu_custom_call.1} parent=5 // pred_check_branch
        %228 = sbr.rel (%p226) target = $region36
      $region35: #{tpu_custom_call.1} parent=5 // pred_region
        %s229 = ssub.s32 %s18, 2
        // Predicated region
        $region37: #{tpu_custom_call.1} parent=35 // pred_check
          %p230 = pneg %p73
        $region38: #{tpu_custom_call.1} parent=35 // pred_check_branch
          %232 = sbr.rel (%p230) target = $region40
        $region39: #{tpu_custom_call.1} parent=35 // pred_region
          %s233 = sand.u32 %s58, 1
          %s234 = scalar_lea.sflag [#allocation6], %s233
          %s235 = sand.u32 %s58, 1
          %s236 = smul.addr %s235, 8
          %s237 = scalar_lea.vmem [#allocation7], %s236
          %238 = dma.done %s234, 128
        $region40: #{tpu_custom_call.1} parent=35 // pred_fallthru
          _
      $region36: #{tpu_custom_call.1} parent=5 // pred_fallthru
        _
    $region6: #{tpu_custom_call.1} parent=1 // loop_footer
      %s22 = sadd.s32 1, %s18
    $region7: #{tpu_custom_call.1} parent=1 // loop_footer_branch
      %17 = sbr.rel target = $region3
    $region8: #{tpu_custom_call.1} parent=1 // loop_exit
      _
    %239 = vsyncpa [#allocation5], 1
    %s240 = scalar_lea.sflag [#allocation5], 1
    %241 = vsyncpa %s240, 1
    %242 = vsyncpa [#allocation6], 1
    %s243 = scalar_lea.sflag [#allocation6], 1
    %244 = vsyncpa %s243, 1

</llo_original>
